<compile_context>
chip_gen: v5e
topology: v5e:2x2
jax: 0.10.0
libtpu: 0.0.40
codegen_flags: <defaults>
</compile_context>

<pallas_src>
import functools
import math

import jax
import jax.numpy as jnp
from jax.experimental import pallas as pl
from jax.experimental.pallas import tpu as pltpu


_LANE_WIDTH = 1024       # lane-dense last dim (multiple of 128)
_MAX_BLOCK_ROWS = 256    # 256 rows * 1024 lanes * 4 B = 1 MiB per f32 tile


def _cutoff_kernel(d_ref, o_ref, *, scale, cutoff):
    # d_ref / o_ref: (block_rows, 1024) tiles in VMEM.
    # `scale` (= pi / cutoff) and `cutoff` are compile-time immediates.
    d = d_ref[...].astype(jnp.float32)
    val = 0.5 * jnp.cos(d * scale) + 0.5
    o_ref[...] = jnp.where(d < cutoff, val, 0.0).astype(o_ref.dtype)


def cutoff_forward(distances: jax.Array, cutoff: float) -> jax.Array:
    """Apply the smooth cosine cutoff elementwise to `distances`."""
    orig_shape = distances.shape
    orig_dtype = distances.dtype
    total = math.prod(orig_shape)

    # Flatten to a lane-dense (rows, 1024) slab; rows padded to a multiple of
    # 8 (sublane) and of the row-block size so all grid tiles are uniform.
    rows = -(-total // _LANE_WIDTH)
    rows = max(8, ((rows + 7) // 8) * 8)
    block_rows = min(_MAX_BLOCK_ROWS, rows)
    n_blocks = -(-rows // block_rows)
    rows = n_blocks * block_rows
    padded_total = rows * _LANE_WIDTH

    flat = distances.reshape((total,))
    if padded_total != total:
        # Padded elements compute f(0)=1 harmlessly and are sliced off below.
        flat = jnp.pad(flat, (0, padded_total - total))
    x2d = flat.reshape((rows, _LANE_WIDTH))

    kernel = functools.partial(
        _cutoff_kernel,
        scale=float(math.pi / float(cutoff)),
        cutoff=float(cutoff),
    )

    out2d = pl.pallas_call(
        kernel,
        out_shape=jax.ShapeDtypeStruct((rows, _LANE_WIDTH), orig_dtype),
        grid=(n_blocks,),
        in_specs=[pl.BlockSpec((block_rows, _LANE_WIDTH), lambda i: (i, 0))],
        out_specs=pl.BlockSpec((block_rows, _LANE_WIDTH), lambda i: (i, 0)),
        compiler_params=pltpu.CompilerParams(
            dimension_semantics=("parallel",),
        ),
    )(x2d)

    return out2d.reshape((padded_total,))[:total].reshape(orig_shape)


def _reference(distances, cutoff):
    d32 = distances.astype(jnp.float32)
    ref = jnp.where(
        d32 < cutoff,
        0.5 * (jnp.cos(jnp.pi * d32 / cutoff) + 1.0),
        0.0,
    )
    return ref.astype(distances.dtype)


if __name__ == "__main__":
    key = jax.random.PRNGKey(0)
    cutoff = 5.0  # deterministic value for the registered buffer

    # Case 1: lane-aligned shape.
    k1, k2 = jax.random.split(key)
    B, N = 8, 128
    distances = jax.random.uniform(k1, (B, N), dtype=jnp.float32) * 8.0
    out = jax.block_until_ready(cutoff_forward(distances, cutoff))
    assert out.shape == (B, N)
    assert jnp.allclose(out, _reference(distances, cutoff), atol=1e-5, rtol=1e-5)

    # Case 2: ragged shape (exercises the pad/slice path).
    d2 = jax.random.uniform(k2, (7, 50), dtype=jnp.float32) * 8.0
    out2 = jax.block_until_ready(cutoff_forward(d2, cutoff))
    assert out2.shape == (7, 50)
    assert jnp.allclose(out2, _reference(d2, cutoff), atol=1e-5, rtol=1e-5)

    print("KERNEL_OK")
</pallas_src>

<mosaic_0001>
module attributes {stable_mosaic.version = 11 : i64} {
  func.func @_cutoff_kernel(%arg0: i32, %arg1: memref<8x1024xf32, #tpu.memory_space<vmem>>, %arg2: memref<8x1024xf32, #tpu.memory_space<vmem>>) attributes {dimension_semantics = [#tpu.dimension_semantics<parallel>], iteration_bounds = array<i64: 1>, scalar_prefetch = 0 : i64, scratch_operands = 0 : i64, tpu.core_type = #tpu.core_type<tc>, window_params = [{transform_indices = @transform_0, window_bounds = array<i64: 8, 1024>}, {transform_indices = @transform_1, window_bounds = array<i64: 8, 1024>}]} {
    %c0 = arith.constant 0 : index
    %c0_0 = arith.constant 0 : index
    %0 = vector.load %arg1[%c0, %c0_0] : memref<8x1024xf32, #tpu.memory_space<vmem>>, vector<8x1024xf32>
    %cst = arith.constant 0.628318548 : f32
    %1 = vector.broadcast %cst : f32 to vector<8x1024xf32>
    %2 = arith.mulf %0, %1 : vector<8x1024xf32>
    %3 = math.cos %2 : vector<8x1024xf32>
    %cst_1 = arith.constant 5.000000e-01 : f32
    %4 = vector.broadcast %cst_1 : f32 to vector<8x1024xf32>
    %5 = arith.mulf %4, %3 : vector<8x1024xf32>
    %cst_2 = arith.constant 5.000000e-01 : f32
    %6 = vector.broadcast %cst_2 : f32 to vector<8x1024xf32>
    %7 = arith.addf %5, %6 : vector<8x1024xf32>
    %cst_3 = arith.constant 5.000000e+00 : f32
    %8 = vector.broadcast %cst_3 : f32 to vector<8x1024xf32>
    %9 = arith.cmpf olt, %0, %8 : vector<8x1024xf32>
    %cst_4 = arith.constant 0.000000e+00 : f32
    %10 = vector.broadcast %cst_4 : f32 to vector<8x1024xf32>
    %11 = arith.select %9, %7, %10 : vector<8x1024xi1>, vector<8x1024xf32>
    %c0_5 = arith.constant 0 : index
    %c0_6 = arith.constant 0 : index
    %12 = vector.load %arg2[%c0_5, %c0_6] : memref<8x1024xf32, #tpu.memory_space<vmem>>, vector<8x1024xf32>
    tpu.vector_store %arg2[%c0_5, %c0_6], %11 {strides = array<i32>} : memref<8x1024xf32, #tpu.memory_space<vmem>>, vector<8x1024xf32>,
    return
  }
  func.func @transform_0(%arg0: i32) -> (i32, i32) {
    %c0_i32 = arith.constant 0 : i32
    %c0_i32_0 = arith.constant 0 : i32
    return %arg0, %c0_i32 : i32, i32
  }
  func.func @transform_1(%arg0: i32) -> (i32, i32) {
    %c0_i32 = arith.constant 0 : i32
    %c0_i32_0 = arith.constant 0 : i32
    return %arg0, %c0_i32 : i32, i32
  }
}

</mosaic_0001>

<llo_original>
// kernel: tpu_custom_call.1
$region0: #{tpu_custom_call.1}
  #allocation0 [shape = 'u32[]', space=smem, size = 0x4, offset = 0x4, fixed_abs, tag = 'smem constant byte address 0x4 - core index']
  #allocation1 [shape = 'u32[72,128]{1,0:T(1,128)}', space=vmem, size = 0x9000, scoped, tag = 'internal scratch']
  %s0 = inlined_call_operand.hbm [shape: f32[8,1024], index: 0, kind: input, shape index: {}]
  %s1 = inlined_call_operand.hbm [shape: f32[8,1024], index: 1, kind: output, shape index: {}]
  %s2 = sld [smem:[#allocation0]]
  $region18: #{tpu_custom_call.1} parent=0
    _
  %s4 = ssub.s32 1, %s2
  %s5 = scalar_select 0, %s4, %s2
  $region1: #{tpu_custom_call.1} parent=0
    #allocation2 [shape = 'u8[32768]{0}', space=vmem, size = 0x8000, scoped, tag = 'input window, operand 0, single buffered']
    #allocation3 [shape = 's32[1]{0}', space=sflag, size = 0x4, scoped, tag = 'scoped memory for tpu_custom_call.1']
    #allocation4 [shape = 's32[1]{0}', space=sflag, size = 0x4, scoped, tag = 'scoped memory for tpu_custom_call.1']
    #allocation5 [shape = 'u8[32768]{0}', space=vmem, size = 0x8000, scoped, tag = 'output window, operand 0, single buffered']
    %6 = vsyncpa [#allocation3], 0
    %7 = vsyncpa [#allocation4], 0
    // Predicated region
    $region2: #{tpu_custom_call.1} parent=1 // pred_check
      _
    $region3: #{tpu_custom_call.1} parent=1 // pred_check_branch
      %9 = sbr.rel (0) target = $region5
    $region4: #{tpu_custom_call.1} parent=1 // pred_region
      %11 = vsyncadd [#allocation3], 0
      %s13 = sshll.u32 %s0, 4
      %s14 = int_to_ptr.hbm [resolvable:$true] %s13
      %s15 = sshll.u32 [#allocation2], 4
      %s16 = int_to_ptr.vmem [resolvable:$true] %s15
      %18 = dma.hbm_to_vmem [thread:$0]  %s14, 1024, %s16, [#allocation3]
    $region5: #{tpu_custom_call.1} parent=1 // pred_fallthru
      _
    // Predicated region
    $region6: #{tpu_custom_call.1} parent=1 // pred_check
      _
    $region7: #{tpu_custom_call.1} parent=1 // pred_check_branch
      %20 = sbr.rel (0) target = $region9
    $region8: #{tpu_custom_call.1} parent=1 // pred_region
      %22 = dma.done [#allocation3], 1024
    $region9: #{tpu_custom_call.1} parent=1 // pred_fallthru
      _
    %v23 = vld [vmem:[#allocation2] sm:$0xff]
    %v24 = vld [vmem:[#allocation2 + $0x8] sm:$0xff]
    %v25 = vld [vmem:[#allocation2 + $0x10] sm:$0xff]
    %v26 = vld [vmem:[#allocation2 + $0x18] sm:$0xff]
    %v27 = vld [vmem:[#allocation2 + $0x20] sm:$0xff]
    %v28 = vld [vmem:[#allocation2 + $0x28] sm:$0xff]
    %v29 = vld [vmem:[#allocation2 + $0x30] sm:$0xff]
    %v30 = vld [vmem:[#allocation2 + $0x38] sm:$0xff]
    %v31 = vmul.f32 %v23, 0.62831855
    %v32 = vmul.f32 %v24, 0.62831855
    %v33 = vmul.f32 %v25, 0.62831855
    %v34 = vmul.f32 %v26, 0.62831855
    %v35 = vmul.f32 %v27, 0.62831855
    %v36 = vmul.f32 %v28, 0.62831855
    %v37 = vmul.f32 %v29, 0.62831855
    %v38 = vmul.f32 %v30, 0.62831855
    %v39 = vand.u32 2147483647, %v31
    %vm40 = vcmp.le.f32.partialorder %v39, 0.7853982
    %vm41 = vcmp.lt.s32.totalorder %v31, 0
    %v42 = vand.u32 %v31, 2139095040
    %v43 = vshrl.u32 %v42, 23
    %v44 = vsub.s32 %v43, 127
    %v45 = vand.u32 2147483647, %v31
    %v46 = vand.u32 %v45, 8388607
    %v47 = vor.u32 %v46, 8388608
    %v48 = vsub.s32 0, %v47
    %v49 = vadd.s32 %v44, 1
    %vm50 = vcmp.gt.s32.totalorder %v49, 0
    %v51 = vsel %vm50, %v49, 0
    %v52 = vshrl.u32 %v51, 5
    %v53 = vand.u32 %v51, 31
    %v54 = vsub.s32 32, %v53
    %v55 = vshrl.u32 683565275, %v54
    %v56 = vshll.u32 683565275, %v53
    %v57 = vshrl.u32 2475754826, %v54
    %v58 = vor.u32 %v56, %v57
    %v59 = vshll.u32 2475754826, %v53
    %v60 = vshrl.u32 2131351028, %v54
    %v61 = vor.u32 %v59, %v60
    %v62 = vshll.u32 2131351028, %v53
    %v63 = vshrl.u32 2102212464, %v54
    %v64 = vor.u32 %v62, %v63
    %v65 = vshll.u32 2102212464, %v53
    %v66 = vshrl.u32 920167782, %v54
    %v67 = vor.u32 %v65, %v66
    %v68 = vshll.u32 920167782, %v53
    %v69 = vshrl.u32 1326507024, %v54
    %v70 = vor.u32 %v68, %v69
    %vm71 = vcmp.lt.s32.totalorder %v52, 1
    %vm72 = vcmp.lt.s32.totalorder %v52, 2
    %vm73 = vcmp.lt.s32.totalorder %v52, 3
    %vm74 = vcmp.lt.s32.totalorder %v52, 4
    %v75 = vsel %vm71, %v55, %v58
    %v76 = vsel %vm74, %v64, 2102212464
    %v77 = vsel %vm73, %v61, %v76
    %v78 = vsel %vm72, %v75, %v77
    %v79 = vsel %vm71, %v58, %v61
    %v80 = vsel %vm74, %v67, 920167782
    %v81 = vsel %vm73, %v64, %v80
    %v82 = vsel %vm72, %v79, %v81
    %v83 = vsel %vm71, %v61, %v64
    %v84 = vsel %vm74, %v70, 1326507024
    %v85 = vsel %vm73, %v67, %v84
    %v86 = vsel %vm72, %v83, %v85
    %v87 = vshll.u32 %v47, 8
    %v88 = vand.u32 %v87, 65535
    %v89 = vshrl.u32 %v87, 16
    %v90 = vand.u32 %v86, 65535
    %v91 = vshrl.u32 %v86, 16
    %v92 = vmul.u32 %v88, %v90
    %v93 = vmul.u32 %v88, %v91
    %v94 = vmul.u32 %v89, %v90
    %v95 = vmul.u32 %v89, %v91
    %v96 = vshll.u32 %v93, 16
    %v97 = vshrl.u32 %v93, 16
    %v98 = vshll.u32 %v94, 16
    %v99 = vshrl.u32 %v94, 16
    %vm100 = vc.u32 %v92, %v96
    %v101 = vsel %vm100, 1, 0
    %v102 = vadd.s32 %v92, %v96
    %v103 = vadd.s32 %v95, %v101
    %vm104 = vc.u32 %v102, %v98
    %v105 = vsel %vm104, 1, 0
    %v106 = vadd.s32 %v102, %v98
    %v107 = vadd.s32 %v103, %v105
    %v108 = vadd.s32 %v107, %v97
    %v109 = vadd.s32 %v108, %v99
    %v110 = vand.u32 %v87, 65535
    %v111 = vshrl.u32 %v87, 16
    %v112 = vand.u32 %v82, 65535
    %v113 = vshrl.u32 %v82, 16
    %v114 = vmul.u32 %v110, %v112
    %v115 = vmul.u32 %v110, %v113
    %v116 = vmul.u32 %v111, %v112
    %v117 = vmul.u32 %v111, %v113
    %v118 = vshll.u32 %v115, 16
    %v119 = vshrl.u32 %v115, 16
    %v120 = vshll.u32 %v116, 16
    %v121 = vshrl.u32 %v116, 16
    %vm122 = vc.u32 %v114, %v118
    %v123 = vsel %vm122, 1, 0
    %v124 = vadd.s32 %v114, %v118
    %v125 = vadd.s32 %v117, %v123
    %vm126 = vc.u32 %v124, %v120
    %v127 = vsel %vm126, 1, 0
    %v128 = vadd.s32 %v124, %v120
    %v129 = vadd.s32 %v125, %v127
    %v130 = vadd.s32 %v129, %v119
    %v131 = vadd.s32 %v130, %v121
    %v132 = vmul.u32 %v87, %v78
    %v133 = vadd.s32 %v109, %v128
    %vm134 = vc.u32 %v109, %v128
    %v135 = vadd.s32 %v131, 1
    %v136 = vsel %vm134, %v135, %v131
    %v137 = vadd.s32 %v132, %v136
    %v138 = vadd.s32 %v137, 536870912
    %v139 = vshrl.u32 %v138, 30
    %v140 = vshll.u32 %v139, 30
    %v141 = vsub.s32 %v137, %v140
    %vm142 = vcmp.lt.s32.totalorder %v141, 0
    %v143 = vsub.s32 0, %v141
    %v144 = vsel %vm142, %v143, %v141
    %v145 = vclz %v144
    %v146 = vsub.s32 %v145, 2
    %vm147 = vcmp.gt.s32.totalorder 0, %v146
    %v148 = vsel %vm147, 0, %v146
    %v149 = vsub.s32 32, %v148
    %v150 = vshll.u32 %v141, %v148
    %v151 = vshrl.u32 %v133, %v149
    %v152 = vor.u32 %v150, %v151
    %v153 = vsub.s32 4294967266, %v148
    %v154 = vadd.s32 %v153, 127
    %v155 = vshll.u32 %v154, 23
    %v156 = vor.u32 4788187, %v155
    %v157 = vand.u32 2147483647, %v156
    %v159 = vcvt.s32.f32 %v152
    %v160 = vmul.f32 %v159, %v157
    %v161 = vxor.u32 %v160, 2147483648
    %v162 = vsel %vm41, %v161, %v160
    %v163 = vsub.s32 4, %v139
    %v164 = vsel %vm41, %v163, %v139
    %v165 = vsel %vm40, %v31, %v162
    %v166 = vsel %vm40, 0, %v164
    %v167 = vmul.f32 %v165, %v165
    %v168 = vmul.f32 %v167, -0.001358992
    %v169 = vadd.f32 %v168, 0.041655596
    %v170 = vmul.f32 %v167, %v169
    %v171 = vadd.f32 %v170, -0.4999988
    %v172 = vmul.f32 %v167, %v171
    %v173 = vadd.f32 1.0, %v172
    %v174 = vmul.f32 %v165, %v165
    %v175 = vmul.f32 %v174, -0.00019511016
    %v176 = vadd.f32 %v175, 0.008332121
    %v177 = vmul.f32 %v174, %v176
    %v178 = vadd.f32 %v177, -0.16666654
    %v179 = vmul.f32 %v174, %v178
    %v180 = vadd.f32 %v179, 1.0
    %v181 = vmul.f32 %v180, %v165
    %vm182 = vweird.f32 %v31
    %v183 = vand.u32 %v166, 3
    %vm184 = vcmp.lt.s32.totalorder %v183, 2
    %vm185 = vcmp.eq.s32.totalorder %v183, 0
    %v186 = vxor.u32 %v181, 2147483648
    %v187 = vsel %vm185, %v173, %v186
    %vm188 = vcmp.eq.s32.totalorder %v183, 2
    %v189 = vxor.u32 %v173, 2147483648
    %v190 = vsel %vm188, %v189, %v181
    %v191 = vsel %vm184, %v187, %v190
    %v192 = vsel %vm182, nan, %v191
    %v193 = vand.u32 2147483647, %v32
    %vm194 = vcmp.le.f32.partialorder %v193, 0.7853982
    %vm195 = vcmp.lt.s32.totalorder %v32, 0
    %v196 = vand.u32 %v32, 2139095040
    %v197 = vshrl.u32 %v196, 23
    %v198 = vsub.s32 %v197, 127
    %v199 = vand.u32 2147483647, %v32
    %v200 = vand.u32 %v199, 8388607
    %v201 = vor.u32 %v200, 8388608
    %v202 = vsub.s32 0, %v201
    %v203 = vadd.s32 %v198, 1
    %vm204 = vcmp.gt.s32.totalorder %v203, 0
    %v205 = vsel %vm204, %v203, 0
    %v206 = vshrl.u32 %v205, 5
    %v207 = vand.u32 %v205, 31
    %v208 = vsub.s32 32, %v207
    %v209 = vshrl.u32 683565275, %v208
    %v210 = vshll.u32 683565275, %v207
    %v211 = vshrl.u32 2475754826, %v208
    %v212 = vor.u32 %v210, %v211
    %v213 = vshll.u32 2475754826, %v207
    %v214 = vshrl.u32 2131351028, %v208
    %v215 = vor.u32 %v213, %v214
    %v216 = vshll.u32 2131351028, %v207
    %v217 = vshrl.u32 2102212464, %v208
    %v218 = vor.u32 %v216, %v217
    %v219 = vshll.u32 2102212464, %v207
    %v220 = vshrl.u32 920167782, %v208
    %v221 = vor.u32 %v219, %v220
    %v222 = vshll.u32 920167782, %v207
    %v223 = vshrl.u32 1326507024, %v208
    %v224 = vor.u32 %v222, %v223
    %vm225 = vcmp.lt.s32.totalorder %v206, 1
    %vm226 = vcmp.lt.s32.totalorder %v206, 2
    %vm227 = vcmp.lt.s32.totalorder %v206, 3
    %vm228 = vcmp.lt.s32.totalorder %v206, 4
    %v229 = vsel %vm225, %v209, %v212
    %v230 = vsel %vm228, %v218, 2102212464
    %v231 = vsel %vm227, %v215, %v230
    %v232 = vsel %vm226, %v229, %v231
    %v233 = vsel %vm225, %v212, %v215
    %v234 = vsel %vm228, %v221, 920167782
    %v235 = vsel %vm227, %v218, %v234
    %v236 = vsel %vm226, %v233, %v235
    %v237 = vsel %vm225, %v215, %v218
    %v238 = vsel %vm228, %v224, 1326507024
    %v239 = vsel %vm227, %v221, %v238
    %v240 = vsel %vm226, %v237, %v239
    %v241 = vshll.u32 %v201, 8
    %v242 = vand.u32 %v241, 65535
    %v243 = vshrl.u32 %v241, 16
    %v244 = vand.u32 %v240, 65535
    %v245 = vshrl.u32 %v240, 16
    %v246 = vmul.u32 %v242, %v244
    %v247 = vmul.u32 %v242, %v245
    %v248 = vmul.u32 %v243, %v244
    %v249 = vmul.u32 %v243, %v245
    %v250 = vshll.u32 %v247, 16
    %v251 = vshrl.u32 %v247, 16
    %v252 = vshll.u32 %v248, 16
    %v253 = vshrl.u32 %v248, 16
    %vm254 = vc.u32 %v246, %v250
    %v255 = vsel %vm254, 1, 0
    %v256 = vadd.s32 %v246, %v250
    %v257 = vadd.s32 %v249, %v255
    %vm258 = vc.u32 %v256, %v252
    %v259 = vsel %vm258, 1, 0
    %v260 = vadd.s32 %v256, %v252
    %v261 = vadd.s32 %v257, %v259
    %v262 = vadd.s32 %v261, %v251
    %v263 = vadd.s32 %v262, %v253
    %v264 = vand.u32 %v241, 65535
    %v265 = vshrl.u32 %v241, 16
    %v266 = vand.u32 %v236, 65535
    %v267 = vshrl.u32 %v236, 16
    %v268 = vmul.u32 %v264, %v266
    %v269 = vmul.u32 %v264, %v267
    %v270 = vmul.u32 %v265, %v266
    %v271 = vmul.u32 %v265, %v267
    %v272 = vshll.u32 %v269, 16
    %v273 = vshrl.u32 %v269, 16
    %v274 = vshll.u32 %v270, 16
    %v275 = vshrl.u32 %v270, 16
    %vm276 = vc.u32 %v268, %v272
    %v277 = vsel %vm276, 1, 0
    %v278 = vadd.s32 %v268, %v272
    %v279 = vadd.s32 %v271, %v277
    %vm280 = vc.u32 %v278, %v274
    %v281 = vsel %vm280, 1, 0
    %v282 = vadd.s32 %v278, %v274
    %v283 = vadd.s32 %v279, %v281
    %v284 = vadd.s32 %v283, %v273
    %v285 = vadd.s32 %v284, %v275
    %v286 = vmul.u32 %v241, %v232
    %v287 = vadd.s32 %v263, %v282
    %vm288 = vc.u32 %v263, %v282
    %v289 = vadd.s32 %v285, 1
    %v290 = vsel %vm288, %v289, %v285
    %v291 = vadd.s32 %v286, %v290
    %v292 = vadd.s32 %v291, 536870912
    %v293 = vshrl.u32 %v292, 30
    %v294 = vshll.u32 %v293, 30
    %v295 = vsub.s32 %v291, %v294
    %vm296 = vcmp.lt.s32.totalorder %v295, 0
    %v297 = vsub.s32 0, %v295
    %v298 = vsel %vm296, %v297, %v295
    %v299 = vclz %v298
    %v300 = vsub.s32 %v299, 2
    %vm301 = vcmp.gt.s32.totalorder 0, %v300
    %v302 = vsel %vm301, 0, %v300
    %v303 = vsub.s32 32, %v302
    %v304 = vshll.u32 %v295, %v302
    %v305 = vshrl.u32 %v287, %v303
    %v306 = vor.u32 %v304, %v305
    %v307 = vsub.s32 4294967266, %v302
    %v308 = vadd.s32 %v307, 127
    %v309 = vshll.u32 %v308, 23
    %v310 = vor.u32 4788187, %v309
    %v311 = vand.u32 2147483647, %v310
    %v313 = vcvt.s32.f32 %v306
    %v314 = vmul.f32 %v313, %v311
    %v315 = vxor.u32 %v314, 2147483648
    %v316 = vsel %vm195, %v315, %v314
    %v317 = vsub.s32 4, %v293
    %v318 = vsel %vm195, %v317, %v293
    %v319 = vsel %vm194, %v32, %v316
    %v320 = vsel %vm194, 0, %v318
    %v321 = vmul.f32 %v319, %v319
    %v322 = vmul.f32 %v321, -0.001358992
    %v323 = vadd.f32 %v322, 0.041655596
    %v324 = vmul.f32 %v321, %v323
    %v325 = vadd.f32 %v324, -0.4999988
    %v326 = vmul.f32 %v321, %v325
    %v327 = vadd.f32 1.0, %v326
    %v328 = vmul.f32 %v319, %v319
    %v329 = vmul.f32 %v328, -0.00019511016
    %v330 = vadd.f32 %v329, 0.008332121
    %v331 = vmul.f32 %v328, %v330
    %v332 = vadd.f32 %v331, -0.16666654
    %v333 = vmul.f32 %v328, %v332
    %v334 = vadd.f32 %v333, 1.0
    %v335 = vmul.f32 %v334, %v319
    %vm336 = vweird.f32 %v32
    %v337 = vand.u32 %v320, 3
    %vm338 = vcmp.lt.s32.totalorder %v337, 2
    %vm339 = vcmp.eq.s32.totalorder %v337, 0
    %v340 = vxor.u32 %v335, 2147483648
    %v341 = vsel %vm339, %v327, %v340
    %vm342 = vcmp.eq.s32.totalorder %v337, 2
    %v343 = vxor.u32 %v327, 2147483648
    %v344 = vsel %vm342, %v343, %v335
    %v345 = vsel %vm338, %v341, %v344
    %v346 = vsel %vm336, nan, %v345
    %v347 = vand.u32 2147483647, %v33
    %vm348 = vcmp.le.f32.partialorder %v347, 0.7853982
    %vm349 = vcmp.lt.s32.totalorder %v33, 0
    %v350 = vand.u32 %v33, 2139095040
    %v351 = vshrl.u32 %v350, 23
    %v352 = vsub.s32 %v351, 127
    %v353 = vand.u32 2147483647, %v33
    %v354 = vand.u32 %v353, 8388607
    %v355 = vor.u32 %v354, 8388608
    %v356 = vsub.s32 0, %v355
    %v357 = vadd.s32 %v352, 1
    %vm358 = vcmp.gt.s32.totalorder %v357, 0
    %v359 = vsel %vm358, %v357, 0
    %v360 = vshrl.u32 %v359, 5
    %v361 = vand.u32 %v359, 31
    %v362 = vsub.s32 32, %v361
    %v363 = vshrl.u32 683565275, %v362
    %v364 = vshll.u32 683565275, %v361
    %v365 = vshrl.u32 2475754826, %v362
    %v366 = vor.u32 %v364, %v365
    %v367 = vshll.u32 2475754826, %v361
    %v368 = vshrl.u32 2131351028, %v362
    %v369 = vor.u32 %v367, %v368
    %v370 = vshll.u32 2131351028, %v361
    %v371 = vshrl.u32 2102212464, %v362
    %v372 = vor.u32 %v370, %v371
    %v373 = vshll.u32 2102212464, %v361
    %v374 = vshrl.u32 920167782, %v362
    %v375 = vor.u32 %v373, %v374
    %v376 = vshll.u32 920167782, %v361
    %v377 = vshrl.u32 1326507024, %v362
    %v378 = vor.u32 %v376, %v377
    %vm379 = vcmp.lt.s32.totalorder %v360, 1
    %vm380 = vcmp.lt.s32.totalorder %v360, 2
    %vm381 = vcmp.lt.s32.totalorder %v360, 3
    %vm382 = vcmp.lt.s32.totalorder %v360, 4
    %v383 = vsel %vm379, %v363, %v366
    %v384 = vsel %vm382, %v372, 2102212464
    %v385 = vsel %vm381, %v369, %v384
    %v386 = vsel %vm380, %v383, %v385
    %v387 = vsel %vm379, %v366, %v369
    %v388 = vsel %vm382, %v375, 920167782
    %v389 = vsel %vm381, %v372, %v388
    %v390 = vsel %vm380, %v387, %v389
    %v391 = vsel %vm379, %v369, %v372
    %v392 = vsel %vm382, %v378, 1326507024
    %v393 = vsel %vm381, %v375, %v392
    %v394 = vsel %vm380, %v391, %v393
    %v395 = vshll.u32 %v355, 8
    %v396 = vand.u32 %v395, 65535
    %v397 = vshrl.u32 %v395, 16
    %v398 = vand.u32 %v394, 65535
    %v399 = vshrl.u32 %v394, 16
    %v400 = vmul.u32 %v396, %v398
    %v401 = vmul.u32 %v396, %v399
    %v402 = vmul.u32 %v397, %v398
    %v403 = vmul.u32 %v397, %v399
    %v404 = vshll.u32 %v401, 16
    %v405 = vshrl.u32 %v401, 16
    %v406 = vshll.u32 %v402, 16
    %v407 = vshrl.u32 %v402, 16
    %vm408 = vc.u32 %v400, %v404
    %v409 = vsel %vm408, 1, 0
    %v410 = vadd.s32 %v400, %v404
    %v411 = vadd.s32 %v403, %v409
    %vm412 = vc.u32 %v410, %v406
    %v413 = vsel %vm412, 1, 0
    %v414 = vadd.s32 %v410, %v406
    %v415 = vadd.s32 %v411, %v413
    %v416 = vadd.s32 %v415, %v405
    %v417 = vadd.s32 %v416, %v407
    %v418 = vand.u32 %v395, 65535
    %v419 = vshrl.u32 %v395, 16
    %v420 = vand.u32 %v390, 65535
    %v421 = vshrl.u32 %v390, 16
    %v422 = vmul.u32 %v418, %v420
    %v423 = vmul.u32 %v418, %v421
    %v424 = vmul.u32 %v419, %v420
    %v425 = vmul.u32 %v419, %v421
    %v426 = vshll.u32 %v423, 16
    %v427 = vshrl.u32 %v423, 16
    %v428 = vshll.u32 %v424, 16
    %v429 = vshrl.u32 %v424, 16
    %vm430 = vc.u32 %v422, %v426
    %v431 = vsel %vm430, 1, 0
    %v432 = vadd.s32 %v422, %v426
    %v433 = vadd.s32 %v425, %v431
    %vm434 = vc.u32 %v432, %v428
    %v435 = vsel %vm434, 1, 0
    %v436 = vadd.s32 %v432, %v428
    %v437 = vadd.s32 %v433, %v435
    %v438 = vadd.s32 %v437, %v427
    %v439 = vadd.s32 %v438, %v429
    %v440 = vmul.u32 %v395, %v386
    %v441 = vadd.s32 %v417, %v436
    %vm442 = vc.u32 %v417, %v436
    %v443 = vadd.s32 %v439, 1
    %v444 = vsel %vm442, %v443, %v439
    %v445 = vadd.s32 %v440, %v444
    %v446 = vadd.s32 %v445, 536870912
    %v447 = vshrl.u32 %v446, 30
    %v448 = vshll.u32 %v447, 30
    %v449 = vsub.s32 %v445, %v448
    %vm450 = vcmp.lt.s32.totalorder %v449, 0
    %v451 = vsub.s32 0, %v449
    %v452 = vsel %vm450, %v451, %v449
    %v453 = vclz %v452
    %v454 = vsub.s32 %v453, 2
    %vm455 = vcmp.gt.s32.totalorder 0, %v454
    %v456 = vsel %vm455, 0, %v454
    %v457 = vsub.s32 32, %v456
    %v458 = vshll.u32 %v449, %v456
    %v459 = vshrl.u32 %v441, %v457
    %v460 = vor.u32 %v458, %v459
    %v461 = vsub.s32 4294967266, %v456
    %v462 = vadd.s32 %v461, 127
    %v463 = vshll.u32 %v462, 23
    %v464 = vor.u32 4788187, %v463
    %v465 = vand.u32 2147483647, %v464
    %v467 = vcvt.s32.f32 %v460
    %v468 = vmul.f32 %v467, %v465
    %v469 = vxor.u32 %v468, 2147483648
    %v470 = vsel %vm349, %v469, %v468
    %v471 = vsub.s32 4, %v447
    %v472 = vsel %vm349, %v471, %v447
    %v473 = vsel %vm348, %v33, %v470
    %v474 = vsel %vm348, 0, %v472
    %v475 = vmul.f32 %v473, %v473
    %v476 = vmul.f32 %v475, -0.001358992
    %v477 = vadd.f32 %v476, 0.041655596
    %v478 = vmul.f32 %v475, %v477
    %v479 = vadd.f32 %v478, -0.4999988
    %v480 = vmul.f32 %v475, %v479
    %v481 = vadd.f32 1.0, %v480
    %v482 = vmul.f32 %v473, %v473
    %v483 = vmul.f32 %v482, -0.00019511016
    %v484 = vadd.f32 %v483, 0.008332121
    %v485 = vmul.f32 %v482, %v484
    %v486 = vadd.f32 %v485, -0.16666654
    %v487 = vmul.f32 %v482, %v486
    %v488 = vadd.f32 %v487, 1.0
    %v489 = vmul.f32 %v488, %v473
    %vm490 = vweird.f32 %v33
    %v491 = vand.u32 %v474, 3
    %vm492 = vcmp.lt.s32.totalorder %v491, 2
    %vm493 = vcmp.eq.s32.totalorder %v491, 0
    %v494 = vxor.u32 %v489, 2147483648
    %v495 = vsel %vm493, %v481, %v494
    %vm496 = vcmp.eq.s32.totalorder %v491, 2
    %v497 = vxor.u32 %v481, 2147483648
    %v498 = vsel %vm496, %v497, %v489
    %v499 = vsel %vm492, %v495, %v498
    %v500 = vsel %vm490, nan, %v499
    %v501 = vand.u32 2147483647, %v34
    %vm502 = vcmp.le.f32.partialorder %v501, 0.7853982
    %vm503 = vcmp.lt.s32.totalorder %v34, 0
    %v504 = vand.u32 %v34, 2139095040
    %v505 = vshrl.u32 %v504, 23
    %v506 = vsub.s32 %v505, 127
    %v507 = vand.u32 2147483647, %v34
    %v508 = vand.u32 %v507, 8388607
    %v509 = vor.u32 %v508, 8388608
    %v510 = vsub.s32 0, %v509
    %v511 = vadd.s32 %v506, 1
    %vm512 = vcmp.gt.s32.totalorder %v511, 0
    %v513 = vsel %vm512, %v511, 0
    %v514 = vshrl.u32 %v513, 5
    %v515 = vand.u32 %v513, 31
    %v516 = vsub.s32 32, %v515
    %v517 = vshrl.u32 683565275, %v516
    %v518 = vshll.u32 683565275, %v515
    %v519 = vshrl.u32 2475754826, %v516
    %v520 = vor.u32 %v518, %v519
    %v521 = vshll.u32 2475754826, %v515
    %v522 = vshrl.u32 2131351028, %v516
    %v523 = vor.u32 %v521, %v522
    %v524 = vshll.u32 2131351028, %v515
    %v525 = vshrl.u32 2102212464, %v516
    %v526 = vor.u32 %v524, %v525
    %v527 = vshll.u32 2102212464, %v515
    %v528 = vshrl.u32 920167782, %v516
    %v529 = vor.u32 %v527, %v528
    %v530 = vshll.u32 920167782, %v515
    %v531 = vshrl.u32 1326507024, %v516
    %v532 = vor.u32 %v530, %v531
    %vm533 = vcmp.lt.s32.totalorder %v514, 1
    %vm534 = vcmp.lt.s32.totalorder %v514, 2
    %vm535 = vcmp.lt.s32.totalorder %v514, 3
    %vm536 = vcmp.lt.s32.totalorder %v514, 4
    %v537 = vsel %vm533, %v517, %v520
    %v538 = vsel %vm536, %v526, 2102212464
    %v539 = vsel %vm535, %v523, %v538
    %v540 = vsel %vm534, %v537, %v539
    %v541 = vsel %vm533, %v520, %v523
    %v542 = vsel %vm536, %v529, 920167782
    %v543 = vsel %vm535, %v526, %v542
    %v544 = vsel %vm534, %v541, %v543
    %v545 = vsel %vm533, %v523, %v526
    %v546 = vsel %vm536, %v532, 1326507024
    %v547 = vsel %vm535, %v529, %v546
    %v548 = vsel %vm534, %v545, %v547
    %v549 = vshll.u32 %v509, 8
    %v550 = vand.u32 %v549, 65535
    %v551 = vshrl.u32 %v549, 16
    %v552 = vand.u32 %v548, 65535
    %v553 = vshrl.u32 %v548, 16
    %v554 = vmul.u32 %v550, %v552
    %v555 = vmul.u32 %v550, %v553
    %v556 = vmul.u32 %v551, %v552
    %v557 = vmul.u32 %v551, %v553
    %v558 = vshll.u32 %v555, 16
    %v559 = vshrl.u32 %v555, 16
    %v560 = vshll.u32 %v556, 16
    %v561 = vshrl.u32 %v556, 16
    %vm562 = vc.u32 %v554, %v558
    %v563 = vsel %vm562, 1, 0
    %v564 = vadd.s32 %v554, %v558
    %v565 = vadd.s32 %v557, %v563
    %vm566 = vc.u32 %v564, %v560
    %v567 = vsel %vm566, 1, 0
    %v568 = vadd.s32 %v564, %v560
    %v569 = vadd.s32 %v565, %v567
    %v570 = vadd.s32 %v569, %v559
    %v571 = vadd.s32 %v570, %v561
    %v572 = vand.u32 %v549, 65535
    %v573 = vshrl.u32 %v549, 16
    %v574 = vand.u32 %v544, 65535
    %v575 = vshrl.u32 %v544, 16
    %v576 = vmul.u32 %v572, %v574
    %v577 = vmul.u32 %v572, %v575
    %v578 = vmul.u32 %v573, %v574
    %v579 = vmul.u32 %v573, %v575
    %v580 = vshll.u32 %v577, 16
    %v581 = vshrl.u32 %v577, 16
    %v582 = vshll.u32 %v578, 16
    %v583 = vshrl.u32 %v578, 16
    %vm584 = vc.u32 %v576, %v580
    %v585 = vsel %vm584, 1, 0
    %v586 = vadd.s32 %v576, %v580
    %v587 = vadd.s32 %v579, %v585
    %vm588 = vc.u32 %v586, %v582
    %v589 = vsel %vm588, 1, 0
    %v590 = vadd.s32 %v586, %v582
    %v591 = vadd.s32 %v587, %v589
    %v592 = vadd.s32 %v591, %v581
    %v593 = vadd.s32 %v592, %v583
    %v594 = vmul.u32 %v549, %v540
    %v595 = vadd.s32 %v571, %v590
    %vm596 = vc.u32 %v571, %v590
    %v597 = vadd.s32 %v593, 1
    %v598 = vsel %vm596, %v597, %v593
    %v599 = vadd.s32 %v594, %v598
    %v600 = vadd.s32 %v599, 536870912
    %v601 = vshrl.u32 %v600, 30
    %v602 = vshll.u32 %v601, 30
    %v603 = vsub.s32 %v599, %v602
    %vm604 = vcmp.lt.s32.totalorder %v603, 0
    %v605 = vsub.s32 0, %v603
    %v606 = vsel %vm604, %v605, %v603
    %v607 = vclz %v606
    %v608 = vsub.s32 %v607, 2
    %vm609 = vcmp.gt.s32.totalorder 0, %v608
    %v610 = vsel %vm609, 0, %v608
    %v611 = vsub.s32 32, %v610
    %v612 = vshll.u32 %v603, %v610
    %v613 = vshrl.u32 %v595, %v611
    %v614 = vor.u32 %v612, %v613
    %v615 = vsub.s32 4294967266, %v610
    %v616 = vadd.s32 %v615, 127
    %v617 = vshll.u32 %v616, 23
    %v618 = vor.u32 4788187, %v617
    %v619 = vand.u32 2147483647, %v618
    %v621 = vcvt.s32.f32 %v614
    %v622 = vmul.f32 %v621, %v619
    %v623 = vxor.u32 %v622, 2147483648
    %v624 = vsel %vm503, %v623, %v622
    %v625 = vsub.s32 4, %v601
    %v626 = vsel %vm503, %v625, %v601
    %v627 = vsel %vm502, %v34, %v624
    %v628 = vsel %vm502, 0, %v626
    %v629 = vmul.f32 %v627, %v627
    %v630 = vmul.f32 %v629, -0.001358992
    %v631 = vadd.f32 %v630, 0.041655596
    %v632 = vmul.f32 %v629, %v631
    %v633 = vadd.f32 %v632, -0.4999988
    %v634 = vmul.f32 %v629, %v633
    %v635 = vadd.f32 1.0, %v634
    %v636 = vmul.f32 %v627, %v627
    %v637 = vmul.f32 %v636, -0.00019511016
    %v638 = vadd.f32 %v637, 0.008332121
    %v639 = vmul.f32 %v636, %v638
    %v640 = vadd.f32 %v639, -0.16666654
    %v641 = vmul.f32 %v636, %v640
    %v642 = vadd.f32 %v641, 1.0
    %v643 = vmul.f32 %v642, %v627
    %vm644 = vweird.f32 %v34
    %v645 = vand.u32 %v628, 3
    %vm646 = vcmp.lt.s32.totalorder %v645, 2
    %vm647 = vcmp.eq.s32.totalorder %v645, 0
    %v648 = vxor.u32 %v643, 2147483648
    %v649 = vsel %vm647, %v635, %v648
    %vm650 = vcmp.eq.s32.totalorder %v645, 2
    %v651 = vxor.u32 %v635, 2147483648
    %v652 = vsel %vm650, %v651, %v643
    %v653 = vsel %vm646, %v649, %v652
    %v654 = vsel %vm644, nan, %v653
    %v655 = vand.u32 2147483647, %v35
    %vm656 = vcmp.le.f32.partialorder %v655, 0.7853982
    %vm657 = vcmp.lt.s32.totalorder %v35, 0
    %v658 = vand.u32 %v35, 2139095040
    %v659 = vshrl.u32 %v658, 23
    %v660 = vsub.s32 %v659, 127
    %v661 = vand.u32 2147483647, %v35
    %v662 = vand.u32 %v661, 8388607
    %v663 = vor.u32 %v662, 8388608
    %v664 = vsub.s32 0, %v663
    %v665 = vadd.s32 %v660, 1
    %vm666 = vcmp.gt.s32.totalorder %v665, 0
    %v667 = vsel %vm666, %v665, 0
    %v668 = vshrl.u32 %v667, 5
    %v669 = vand.u32 %v667, 31
    %v670 = vsub.s32 32, %v669
    %v671 = vshrl.u32 683565275, %v670
    %v672 = vshll.u32 683565275, %v669
    %v673 = vshrl.u32 2475754826, %v670
    %v674 = vor.u32 %v672, %v673
    %v675 = vshll.u32 2475754826, %v669
    %v676 = vshrl.u32 2131351028, %v670
    %v677 = vor.u32 %v675, %v676
    %v678 = vshll.u32 2131351028, %v669
    %v679 = vshrl.u32 2102212464, %v670
    %v680 = vor.u32 %v678, %v679
    %v681 = vshll.u32 2102212464, %v669
    %v682 = vshrl.u32 920167782, %v670
    %v683 = vor.u32 %v681, %v682
    %v684 = vshll.u32 920167782, %v669
    %v685 = vshrl.u32 1326507024, %v670
    %v686 = vor.u32 %v684, %v685
    %vm687 = vcmp.lt.s32.totalorder %v668, 1
    %vm688 = vcmp.lt.s32.totalorder %v668, 2
    %vm689 = vcmp.lt.s32.totalorder %v668, 3
    %vm690 = vcmp.lt.s32.totalorder %v668, 4
    %v691 = vsel %vm687, %v671, %v674
    %v692 = vsel %vm690, %v680, 2102212464
    %v693 = vsel %vm689, %v677, %v692
    %v694 = vsel %vm688, %v691, %v693
    %v695 = vsel %vm687, %v674, %v677
    %v696 = vsel %vm690, %v683, 920167782
    %v697 = vsel %vm689, %v680, %v696
    %v698 = vsel %vm688, %v695, %v697
    %v699 = vsel %vm687, %v677, %v680
    %v700 = vsel %vm690, %v686, 1326507024
    %v701 = vsel %vm689, %v683, %v700
    %v702 = vsel %vm688, %v699, %v701
    %v703 = vshll.u32 %v663, 8
    %v704 = vand.u32 %v703, 65535
    %v705 = vshrl.u32 %v703, 16
    %v706 = vand.u32 %v702, 65535
    %v707 = vshrl.u32 %v702, 16
    %v708 = vmul.u32 %v704, %v706
    %v709 = vmul.u32 %v704, %v707
    %v710 = vmul.u32 %v705, %v706
    %v711 = vmul.u32 %v705, %v707
    %v712 = vshll.u32 %v709, 16
    %v713 = vshrl.u32 %v709, 16
    %v714 = vshll.u32 %v710, 16
    %v715 = vshrl.u32 %v710, 16
    %vm716 = vc.u32 %v708, %v712
    %v717 = vsel %vm716, 1, 0
    %v718 = vadd.s32 %v708, %v712
    %v719 = vadd.s32 %v711, %v717
    %vm720 = vc.u32 %v718, %v714
    %v721 = vsel %vm720, 1, 0
    %v722 = vadd.s32 %v718, %v714
    %v723 = vadd.s32 %v719, %v721
    %v724 = vadd.s32 %v723, %v713
    %v725 = vadd.s32 %v724, %v715
    %v726 = vand.u32 %v703, 65535
    %v727 = vshrl.u32 %v703, 16
    %v728 = vand.u32 %v698, 65535
    %v729 = vshrl.u32 %v698, 16
    %v730 = vmul.u32 %v726, %v728
    %v731 = vmul.u32 %v726, %v729
    %v732 = vmul.u32 %v727, %v728
    %v733 = vmul.u32 %v727, %v729
    %v734 = vshll.u32 %v731, 16
    %v735 = vshrl.u32 %v731, 16
    %v736 = vshll.u32 %v732, 16
    %v737 = vshrl.u32 %v732, 16
    %vm738 = vc.u32 %v730, %v734
    %v739 = vsel %vm738, 1, 0
    %v740 = vadd.s32 %v730, %v734
    %v741 = vadd.s32 %v733, %v739
    %vm742 = vc.u32 %v740, %v736
    %v743 = vsel %vm742, 1, 0
    %v744 = vadd.s32 %v740, %v736
    %v745 = vadd.s32 %v741, %v743
    %v746 = vadd.s32 %v745, %v735
    %v747 = vadd.s32 %v746, %v737
    %v748 = vmul.u32 %v703, %v694
    %v749 = vadd.s32 %v725, %v744
    %vm750 = vc.u32 %v725, %v744
    %v751 = vadd.s32 %v747, 1
    %v752 = vsel %vm750, %v751, %v747
    %v753 = vadd.s32 %v748, %v752
    %v754 = vadd.s32 %v753, 536870912
    %v755 = vshrl.u32 %v754, 30
    %v756 = vshll.u32 %v755, 30
    %v757 = vsub.s32 %v753, %v756
    %vm758 = vcmp.lt.s32.totalorder %v757, 0
    %v759 = vsub.s32 0, %v757
    %v760 = vsel %vm758, %v759, %v757
    %v761 = vclz %v760
    %v762 = vsub.s32 %v761, 2
    %vm763 = vcmp.gt.s32.totalorder 0, %v762
    %v764 = vsel %vm763, 0, %v762
    %v765 = vsub.s32 32, %v764
    %v766 = vshll.u32 %v757, %v764
    %v767 = vshrl.u32 %v749, %v765
    %v768 = vor.u32 %v766, %v767
    %v769 = vsub.s32 4294967266, %v764
    %v770 = vadd.s32 %v769, 127
    %v771 = vshll.u32 %v770, 23
    %v772 = vor.u32 4788187, %v771
    %v773 = vand.u32 2147483647, %v772
    %v775 = vcvt.s32.f32 %v768
    %v776 = vmul.f32 %v775, %v773
    %v777 = vxor.u32 %v776, 2147483648
    %v778 = vsel %vm657, %v777, %v776
    %v779 = vsub.s32 4, %v755
    %v780 = vsel %vm657, %v779, %v755
    %v781 = vsel %vm656, %v35, %v778
    %v782 = vsel %vm656, 0, %v780
    %v783 = vmul.f32 %v781, %v781
    %v784 = vmul.f32 %v783, -0.001358992
    %v785 = vadd.f32 %v784, 0.041655596
    %v786 = vmul.f32 %v783, %v785
    %v787 = vadd.f32 %v786, -0.4999988
    %v788 = vmul.f32 %v783, %v787
    %v789 = vadd.f32 1.0, %v788
    %v790 = vmul.f32 %v781, %v781
    %v791 = vmul.f32 %v790, -0.00019511016
    %v792 = vadd.f32 %v791, 0.008332121
    %v793 = vmul.f32 %v790, %v792
    %v794 = vadd.f32 %v793, -0.16666654
    %v795 = vmul.f32 %v790, %v794
    %v796 = vadd.f32 %v795, 1.0
    %v797 = vmul.f32 %v796, %v781
    %vm798 = vweird.f32 %v35
    %v799 = vand.u32 %v782, 3
    %vm800 = vcmp.lt.s32.totalorder %v799, 2
    %vm801 = vcmp.eq.s32.totalorder %v799, 0
    %v802 = vxor.u32 %v797, 2147483648
    %v803 = vsel %vm801, %v789, %v802
    %vm804 = vcmp.eq.s32.totalorder %v799, 2
    %v805 = vxor.u32 %v789, 2147483648
    %v806 = vsel %vm804, %v805, %v797
    %v807 = vsel %vm800, %v803, %v806
    %v808 = vsel %vm798, nan, %v807
    %v809 = vand.u32 2147483647, %v36
    %vm810 = vcmp.le.f32.partialorder %v809, 0.7853982
    %vm811 = vcmp.lt.s32.totalorder %v36, 0
    %v812 = vand.u32 %v36, 2139095040
    %v813 = vshrl.u32 %v812, 23
    %v814 = vsub.s32 %v813, 127
    %v815 = vand.u32 2147483647, %v36
    %v816 = vand.u32 %v815, 8388607
    %v817 = vor.u32 %v816, 8388608
    %v818 = vsub.s32 0, %v817
    %v819 = vadd.s32 %v814, 1
    %vm820 = vcmp.gt.s32.totalorder %v819, 0
    %v821 = vsel %vm820, %v819, 0
    %v822 = vshrl.u32 %v821, 5
    %v823 = vand.u32 %v821, 31
    %v824 = vsub.s32 32, %v823
    %v825 = vshrl.u32 683565275, %v824
    %v826 = vshll.u32 683565275, %v823
    %v827 = vshrl.u32 2475754826, %v824
    %v828 = vor.u32 %v826, %v827
    %v829 = vshll.u32 2475754826, %v823
    %v830 = vshrl.u32 2131351028, %v824
    %v831 = vor.u32 %v829, %v830
    %v832 = vshll.u32 2131351028, %v823
    %v833 = vshrl.u32 2102212464, %v824
    %v834 = vor.u32 %v832, %v833
    %v835 = vshll.u32 2102212464, %v823
    %v836 = vshrl.u32 920167782, %v824
    %v837 = vor.u32 %v835, %v836
    %v838 = vshll.u32 920167782, %v823
    %v839 = vshrl.u32 1326507024, %v824
    %v840 = vor.u32 %v838, %v839
    %vm841 = vcmp.lt.s32.totalorder %v822, 1
    %vm842 = vcmp.lt.s32.totalorder %v822, 2
    %vm843 = vcmp.lt.s32.totalorder %v822, 3
    %vm844 = vcmp.lt.s32.totalorder %v822, 4
    %v845 = vsel %vm841, %v825, %v828
    %v846 = vsel %vm844, %v834, 2102212464
    %v847 = vsel %vm843, %v831, %v846
    %v848 = vsel %vm842, %v845, %v847
    %v849 = vsel %vm841, %v828, %v831
    %v850 = vsel %vm844, %v837, 920167782
    %v851 = vsel %vm843, %v834, %v850
    %v852 = vsel %vm842, %v849, %v851
    %v853 = vsel %vm841, %v831, %v834
    %v854 = vsel %vm844, %v840, 1326507024
    %v855 = vsel %vm843, %v837, %v854
    %v856 = vsel %vm842, %v853, %v855
    %v857 = vshll.u32 %v817, 8
    %v858 = vand.u32 %v857, 65535
    %v859 = vshrl.u32 %v857, 16
    %v860 = vand.u32 %v856, 65535
    %v861 = vshrl.u32 %v856, 16
    %v862 = vmul.u32 %v858, %v860
    %v863 = vmul.u32 %v858, %v861
    %v864 = vmul.u32 %v859, %v860
    %v865 = vmul.u32 %v859, %v861
    %v866 = vshll.u32 %v863, 16
    %v867 = vshrl.u32 %v863, 16
    %v868 = vshll.u32 %v864, 16
    %v869 = vshrl.u32 %v864, 16
    %vm870 = vc.u32 %v862, %v866
    %v871 = vsel %vm870, 1, 0
    %v872 = vadd.s32 %v862, %v866
    %v873 = vadd.s32 %v865, %v871
    %vm874 = vc.u32 %v872, %v868
    %v875 = vsel %vm874, 1, 0
    %v876 = vadd.s32 %v872, %v868
    %v877 = vadd.s32 %v873, %v875
    %v878 = vadd.s32 %v877, %v867
    %v879 = vadd.s32 %v878, %v869
    %v880 = vand.u32 %v857, 65535
    %v881 = vshrl.u32 %v857, 16
    %v882 = vand.u32 %v852, 65535
    %v883 = vshrl.u32 %v852, 16
    %v884 = vmul.u32 %v880, %v882
    %v885 = vmul.u32 %v880, %v883
    %v886 = vmul.u32 %v881, %v882
    %v887 = vmul.u32 %v881, %v883
    %v888 = vshll.u32 %v885, 16
    %v889 = vshrl.u32 %v885, 16
    %v890 = vshll.u32 %v886, 16
    %v891 = vshrl.u32 %v886, 16
    %vm892 = vc.u32 %v884, %v888
    %v893 = vsel %vm892, 1, 0
    %v894 = vadd.s32 %v884, %v888
    %v895 = vadd.s32 %v887, %v893
    %vm896 = vc.u32 %v894, %v890
    %v897 = vsel %vm896, 1, 0
    %v898 = vadd.s32 %v894, %v890
    %v899 = vadd.s32 %v895, %v897
    %v900 = vadd.s32 %v899, %v889
    %v901 = vadd.s32 %v900, %v891
    %v902 = vmul.u32 %v857, %v848
    %v903 = vadd.s32 %v879, %v898
    %vm904 = vc.u32 %v879, %v898
    %v905 = vadd.s32 %v901, 1
    %v906 = vsel %vm904, %v905, %v901
    %v907 = vadd.s32 %v902, %v906
    %v908 = vadd.s32 %v907, 536870912
    %v909 = vshrl.u32 %v908, 30
    %v910 = vshll.u32 %v909, 30
    %v911 = vsub.s32 %v907, %v910
    %vm912 = vcmp.lt.s32.totalorder %v911, 0
    %v913 = vsub.s32 0, %v911
    %v914 = vsel %vm912, %v913, %v911
    %v915 = vclz %v914
    %v916 = vsub.s32 %v915, 2
    %vm917 = vcmp.gt.s32.totalorder 0, %v916
    %v918 = vsel %vm917, 0, %v916
    %v919 = vsub.s32 32, %v918
    %v920 = vshll.u32 %v911, %v918
    %v921 = vshrl.u32 %v903, %v919
    %v922 = vor.u32 %v920, %v921
    %v923 = vsub.s32 4294967266, %v918
    %v924 = vadd.s32 %v923, 127
    %v925 = vshll.u32 %v924, 23
    %v926 = vor.u32 4788187, %v925
    %v927 = vand.u32 2147483647, %v926
    %v929 = vcvt.s32.f32 %v922
    %v930 = vmul.f32 %v929, %v927
    %v931 = vxor.u32 %v930, 2147483648
    %v932 = vsel %vm811, %v931, %v930
    %v933 = vsub.s32 4, %v909
    %v934 = vsel %vm811, %v933, %v909
    %v935 = vsel %vm810, %v36, %v932
    %v936 = vsel %vm810, 0, %v934
    %v937 = vmul.f32 %v935, %v935
    %v938 = vmul.f32 %v937, -0.001358992
    %v939 = vadd.f32 %v938, 0.041655596
    %v940 = vmul.f32 %v937, %v939
    %v941 = vadd.f32 %v940, -0.4999988
    %v942 = vmul.f32 %v937, %v941
    %v943 = vadd.f32 1.0, %v942
    %v944 = vmul.f32 %v935, %v935
    %v945 = vmul.f32 %v944, -0.00019511016
    %v946 = vadd.f32 %v945, 0.008332121
    %v947 = vmul.f32 %v944, %v946
    %v948 = vadd.f32 %v947, -0.16666654
    %v949 = vmul.f32 %v944, %v948
    %v950 = vadd.f32 %v949, 1.0
    %v951 = vmul.f32 %v950, %v935
    %vm952 = vweird.f32 %v36
    %v953 = vand.u32 %v936, 3
    %vm954 = vcmp.lt.s32.totalorder %v953, 2
    %vm955 = vcmp.eq.s32.totalorder %v953, 0
    %v956 = vxor.u32 %v951, 2147483648
    %v957 = vsel %vm955, %v943, %v956
    %vm958 = vcmp.eq.s32.totalorder %v953, 2
    %v959 = vxor.u32 %v943, 2147483648
    %v960 = vsel %vm958, %v959, %v951
    %v961 = vsel %vm954, %v957, %v960
    %v962 = vsel %vm952, nan, %v961
    %v963 = vand.u32 2147483647, %v37
    %vm964 = vcmp.le.f32.partialorder %v963, 0.7853982
    %vm965 = vcmp.lt.s32.totalorder %v37, 0
    %v966 = vand.u32 %v37, 2139095040
    %v967 = vshrl.u32 %v966, 23
    %v968 = vsub.s32 %v967, 127
    %v969 = vand.u32 2147483647, %v37
    %v970 = vand.u32 %v969, 8388607
    %v971 = vor.u32 %v970, 8388608
    %v972 = vsub.s32 0, %v971
    %v973 = vadd.s32 %v968, 1
    %vm974 = vcmp.gt.s32.totalorder %v973, 0
    %v975 = vsel %vm974, %v973, 0
    %v976 = vshrl.u32 %v975, 5
    %v977 = vand.u32 %v975, 31
    %v978 = vsub.s32 32, %v977
    %v979 = vshrl.u32 683565275, %v978
    %v980 = vshll.u32 683565275, %v977
    %v981 = vshrl.u32 2475754826, %v978
    %v982 = vor.u32 %v980, %v981
    %v983 = vshll.u32 2475754826, %v977
    %v984 = vshrl.u32 2131351028, %v978
    %v985 = vor.u32 %v983, %v984
    %v986 = vshll.u32 2131351028, %v977
    %v987 = vshrl.u32 2102212464, %v978
    %v988 = vor.u32 %v986, %v987
    %v989 = vshll.u32 2102212464, %v977
    %v990 = vshrl.u32 920167782, %v978
    %v991 = vor.u32 %v989, %v990
    %v992 = vshll.u32 920167782, %v977
    %v993 = vshrl.u32 1326507024, %v978
    %v994 = vor.u32 %v992, %v993
    %vm995 = vcmp.lt.s32.totalorder %v976, 1
    %vm996 = vcmp.lt.s32.totalorder %v976, 2
    %vm997 = vcmp.lt.s32.totalorder %v976, 3
    %vm998 = vcmp.lt.s32.totalorder %v976, 4
    %v999 = vsel %vm995, %v979, %v982
    %v1000 = vsel %vm998, %v988, 2102212464
    %v1001 = vsel %vm997, %v985, %v1000
    %v1002 = vsel %vm996, %v999, %v1001
    %v1003 = vsel %vm995, %v982, %v985
    %v1004 = vsel %vm998, %v991, 920167782
    %v1005 = vsel %vm997, %v988, %v1004
    %v1006 = vsel %vm996, %v1003, %v1005
    %v1007 = vsel %vm995, %v985, %v988
    %v1008 = vsel %vm998, %v994, 1326507024
    %v1009 = vsel %vm997, %v991, %v1008
    %v1010 = vsel %vm996, %v1007, %v1009
    %v1011 = vshll.u32 %v971, 8
    %v1012 = vand.u32 %v1011, 65535
    %v1013 = vshrl.u32 %v1011, 16
    %v1014 = vand.u32 %v1010, 65535
    %v1015 = vshrl.u32 %v1010, 16
    %v1016 = vmul.u32 %v1012, %v1014
    %v1017 = vmul.u32 %v1012, %v1015
    %v1018 = vmul.u32 %v1013, %v1014
    %v1019 = vmul.u32 %v1013, %v1015
    %v1020 = vshll.u32 %v1017, 16
    %v1021 = vshrl.u32 %v1017, 16
    %v1022 = vshll.u32 %v1018, 16
    %v1023 = vshrl.u32 %v1018, 16
    %vm1024 = vc.u32 %v1016, %v1020
    %v1025 = vsel %vm1024, 1, 0
    %v1026 = vadd.s32 %v1016, %v1020
    %v1027 = vadd.s32 %v1019, %v1025
    %vm1028 = vc.u32 %v1026, %v1022
    %v1029 = vsel %vm1028, 1, 0
    %v1030 = vadd.s32 %v1026, %v1022
    %v1031 = vadd.s32 %v1027, %v1029
    %v1032 = vadd.s32 %v1031, %v1021
    %v1033 = vadd.s32 %v1032, %v1023
    %v1034 = vand.u32 %v1011, 65535
    %v1035 = vshrl.u32 %v1011, 16
    %v1036 = vand.u32 %v1006, 65535
    %v1037 = vshrl.u32 %v1006, 16
    %v1038 = vmul.u32 %v1034, %v1036
    %v1039 = vmul.u32 %v1034, %v1037
    %v1040 = vmul.u32 %v1035, %v1036
    %v1041 = vmul.u32 %v1035, %v1037
    %v1042 = vshll.u32 %v1039, 16
    %v1043 = vshrl.u32 %v1039, 16
    %v1044 = vshll.u32 %v1040, 16
    %v1045 = vshrl.u32 %v1040, 16
    %vm1046 = vc.u32 %v1038, %v1042
    %v1047 = vsel %vm1046, 1, 0
    %v1048 = vadd.s32 %v1038, %v1042
    %v1049 = vadd.s32 %v1041, %v1047
    %vm1050 = vc.u32 %v1048, %v1044
    %v1051 = vsel %vm1050, 1, 0
    %v1052 = vadd.s32 %v1048, %v1044
    %v1053 = vadd.s32 %v1049, %v1051
    %v1054 = vadd.s32 %v1053, %v1043
    %v1055 = vadd.s32 %v1054, %v1045
    %v1056 = vmul.u32 %v1011, %v1002
    %v1057 = vadd.s32 %v1033, %v1052
    %vm1058 = vc.u32 %v1033, %v1052
    %v1059 = vadd.s32 %v1055, 1
    %v1060 = vsel %vm1058, %v1059, %v1055
    %v1061 = vadd.s32 %v1056, %v1060
    %v1062 = vadd.s32 %v1061, 536870912
    %v1063 = vshrl.u32 %v1062, 30
    %v1064 = vshll.u32 %v1063, 30
    %v1065 = vsub.s32 %v1061, %v1064
    %vm1066 = vcmp.lt.s32.totalorder %v1065, 0
    %v1067 = vsub.s32 0, %v1065
    %v1068 = vsel %vm1066, %v1067, %v1065
    %v1069 = vclz %v1068
    %v1070 = vsub.s32 %v1069, 2
    %vm1071 = vcmp.gt.s32.totalorder 0, %v1070
    %v1072 = vsel %vm1071, 0, %v1070
    %v1073 = vsub.s32 32, %v1072
    %v1074 = vshll.u32 %v1065, %v1072
    %v1075 = vshrl.u32 %v1057, %v1073
    %v1076 = vor.u32 %v1074, %v1075
    %v1077 = vsub.s32 4294967266, %v1072
    %v1078 = vadd.s32 %v1077, 127
    %v1079 = vshll.u32 %v1078, 23
    %v1080 = vor.u32 4788187, %v1079
    %v1081 = vand.u32 2147483647, %v1080
    %v1083 = vcvt.s32.f32 %v1076
    %v1084 = vmul.f32 %v1083, %v1081
    %v1085 = vxor.u32 %v1084, 2147483648
    %v1086 = vsel %vm965, %v1085, %v1084
    %v1087 = vsub.s32 4, %v1063
    %v1088 = vsel %vm965, %v1087, %v1063
    %v1089 = vsel %vm964, %v37, %v1086
    %v1090 = vsel %vm964, 0, %v1088
    %v1091 = vmul.f32 %v1089, %v1089
    %v1092 = vmul.f32 %v1091, -0.001358992
    %v1093 = vadd.f32 %v1092, 0.041655596
    %v1094 = vmul.f32 %v1091, %v1093
    %v1095 = vadd.f32 %v1094, -0.4999988
    %v1096 = vmul.f32 %v1091, %v1095
    %v1097 = vadd.f32 1.0, %v1096
    %v1098 = vmul.f32 %v1089, %v1089
    %v1099 = vmul.f32 %v1098, -0.00019511016
    %v1100 = vadd.f32 %v1099, 0.008332121
    %v1101 = vmul.f32 %v1098, %v1100
    %v1102 = vadd.f32 %v1101, -0.16666654
    %v1103 = vmul.f32 %v1098, %v1102
    %v1104 = vadd.f32 %v1103, 1.0
    %v1105 = vmul.f32 %v1104, %v1089
    %vm1106 = vweird.f32 %v37
    %v1107 = vand.u32 %v1090, 3
    %vm1108 = vcmp.lt.s32.totalorder %v1107, 2
    %vm1109 = vcmp.eq.s32.totalorder %v1107, 0
    %v1110 = vxor.u32 %v1105, 2147483648
    %v1111 = vsel %vm1109, %v1097, %v1110
    %vm1112 = vcmp.eq.s32.totalorder %v1107, 2
    %v1113 = vxor.u32 %v1097, 2147483648
    %v1114 = vsel %vm1112, %v1113, %v1105
    %v1115 = vsel %vm1108, %v1111, %v1114
    %v1116 = vsel %vm1106, nan, %v1115
    %v1117 = vand.u32 2147483647, %v38
    %vm1118 = vcmp.le.f32.partialorder %v1117, 0.7853982
    %vm1119 = vcmp.lt.s32.totalorder %v38, 0
    %v1120 = vand.u32 %v38, 2139095040
    %v1121 = vshrl.u32 %v1120, 23
    %v1122 = vsub.s32 %v1121, 127
    %v1123 = vand.u32 2147483647, %v38
    %v1124 = vand.u32 %v1123, 8388607
    %v1125 = vor.u32 %v1124, 8388608
    %v1126 = vsub.s32 0, %v1125
    %v1127 = vadd.s32 %v1122, 1
    %vm1128 = vcmp.gt.s32.totalorder %v1127, 0
    %v1129 = vsel %vm1128, %v1127, 0
    %v1130 = vshrl.u32 %v1129, 5
    %v1131 = vand.u32 %v1129, 31
    %v1132 = vsub.s32 32, %v1131
    %v1133 = vshrl.u32 683565275, %v1132
    %v1134 = vshll.u32 683565275, %v1131
    %v1135 = vshrl.u32 2475754826, %v1132
    %v1136 = vor.u32 %v1134, %v1135
    %v1137 = vshll.u32 2475754826, %v1131
    %v1138 = vshrl.u32 2131351028, %v1132
    %v1139 = vor.u32 %v1137, %v1138
    %v1140 = vshll.u32 2131351028, %v1131
    %v1141 = vshrl.u32 2102212464, %v1132
    %v1142 = vor.u32 %v1140, %v1141
    %v1143 = vshll.u32 2102212464, %v1131
    %v1144 = vshrl.u32 920167782, %v1132
    %v1145 = vor.u32 %v1143, %v1144
    %v1146 = vshll.u32 920167782, %v1131
    %v1147 = vshrl.u32 1326507024, %v1132
    %v1148 = vor.u32 %v1146, %v1147
    %vm1149 = vcmp.lt.s32.totalorder %v1130, 1
    %vm1150 = vcmp.lt.s32.totalorder %v1130, 2
    %vm1151 = vcmp.lt.s32.totalorder %v1130, 3
    %vm1152 = vcmp.lt.s32.totalorder %v1130, 4
    %v1153 = vsel %vm1149, %v1133, %v1136
    %v1154 = vsel %vm1152, %v1142, 2102212464
    %v1155 = vsel %vm1151, %v1139, %v1154
    %v1156 = vsel %vm1150, %v1153, %v1155
    %v1157 = vsel %vm1149, %v1136, %v1139
    %v1158 = vsel %vm1152, %v1145, 920167782
    %v1159 = vsel %vm1151, %v1142, %v1158
    %v1160 = vsel %vm1150, %v1157, %v1159
    %v1161 = vsel %vm1149, %v1139, %v1142
    %v1162 = vsel %vm1152, %v1148, 1326507024
    %v1163 = vsel %vm1151, %v1145, %v1162
    %v1164 = vsel %vm1150, %v1161, %v1163
    %v1165 = vshll.u32 %v1125, 8
    %v1166 = vand.u32 %v1165, 65535
    %v1167 = vshrl.u32 %v1165, 16
    %v1168 = vand.u32 %v1164, 65535
    %v1169 = vshrl.u32 %v1164, 16
    %v1170 = vmul.u32 %v1166, %v1168
    %v1171 = vmul.u32 %v1166, %v1169
    %v1172 = vmul.u32 %v1167, %v1168
    %v1173 = vmul.u32 %v1167, %v1169
    %v1174 = vshll.u32 %v1171, 16
    %v1175 = vshrl.u32 %v1171, 16
    %v1176 = vshll.u32 %v1172, 16
    %v1177 = vshrl.u32 %v1172, 16
    %vm1178 = vc.u32 %v1170, %v1174
    %v1179 = vsel %vm1178, 1, 0
    %v1180 = vadd.s32 %v1170, %v1174
    %v1181 = vadd.s32 %v1173, %v1179
    %vm1182 = vc.u32 %v1180, %v1176
    %v1183 = vsel %vm1182, 1, 0
    %v1184 = vadd.s32 %v1180, %v1176
    %v1185 = vadd.s32 %v1181, %v1183
    %v1186 = vadd.s32 %v1185, %v1175
    %v1187 = vadd.s32 %v1186, %v1177
    %v1188 = vand.u32 %v1165, 65535
    %v1189 = vshrl.u32 %v1165, 16
    %v1190 = vand.u32 %v1160, 65535
    %v1191 = vshrl.u32 %v1160, 16
    %v1192 = vmul.u32 %v1188, %v1190
    %v1193 = vmul.u32 %v1188, %v1191
    %v1194 = vmul.u32 %v1189, %v1190
    %v1195 = vmul.u32 %v1189, %v1191
    %v1196 = vshll.u32 %v1193, 16
    %v1197 = vshrl.u32 %v1193, 16
    %v1198 = vshll.u32 %v1194, 16
    %v1199 = vshrl.u32 %v1194, 16
    %vm1200 = vc.u32 %v1192, %v1196
    %v1201 = vsel %vm1200, 1, 0
    %v1202 = vadd.s32 %v1192, %v1196
    %v1203 = vadd.s32 %v1195, %v1201
    %vm1204 = vc.u32 %v1202, %v1198
    %v1205 = vsel %vm1204, 1, 0
    %v1206 = vadd.s32 %v1202, %v1198
    %v1207 = vadd.s32 %v1203, %v1205
    %v1208 = vadd.s32 %v1207, %v1197
    %v1209 = vadd.s32 %v1208, %v1199
    %v1210 = vmul.u32 %v1165, %v1156
    %v1211 = vadd.s32 %v1187, %v1206
    %vm1212 = vc.u32 %v1187, %v1206
    %v1213 = vadd.s32 %v1209, 1
    %v1214 = vsel %vm1212, %v1213, %v1209
    %v1215 = vadd.s32 %v1210, %v1214
    %v1216 = vadd.s32 %v1215, 536870912
    %v1217 = vshrl.u32 %v1216, 30
    %v1218 = vshll.u32 %v1217, 30
    %v1219 = vsub.s32 %v1215, %v1218
    %vm1220 = vcmp.lt.s32.totalorder %v1219, 0
    %v1221 = vsub.s32 0, %v1219
    %v1222 = vsel %vm1220, %v1221, %v1219
    %v1223 = vclz %v1222
    %v1224 = vsub.s32 %v1223, 2
    %vm1225 = vcmp.gt.s32.totalorder 0, %v1224
    %v1226 = vsel %vm1225, 0, %v1224
    %v1227 = vsub.s32 32, %v1226
    %v1228 = vshll.u32 %v1219, %v1226
    %v1229 = vshrl.u32 %v1211, %v1227
    %v1230 = vor.u32 %v1228, %v1229
    %v1231 = vsub.s32 4294967266, %v1226
    %v1232 = vadd.s32 %v1231, 127
    %v1233 = vshll.u32 %v1232, 23
    %v1234 = vor.u32 4788187, %v1233
    %v1235 = vand.u32 2147483647, %v1234
    %v1237 = vcvt.s32.f32 %v1230
    %v1238 = vmul.f32 %v1237, %v1235
    %v1239 = vxor.u32 %v1238, 2147483648
    %v1240 = vsel %vm1119, %v1239, %v1238
    %v1241 = vsub.s32 4, %v1217
    %v1242 = vsel %vm1119, %v1241, %v1217
    %v1243 = vsel %vm1118, %v38, %v1240
    %v1244 = vsel %vm1118, 0, %v1242
    %v1245 = vmul.f32 %v1243, %v1243
    %v1246 = vmul.f32 %v1245, -0.001358992
    %v1247 = vadd.f32 %v1246, 0.041655596
    %v1248 = vmul.f32 %v1245, %v1247
    %v1249 = vadd.f32 %v1248, -0.4999988
    %v1250 = vmul.f32 %v1245, %v1249
    %v1251 = vadd.f32 1.0, %v1250
    %v1252 = vmul.f32 %v1243, %v1243
    %v1253 = vmul.f32 %v1252, -0.00019511016
    %v1254 = vadd.f32 %v1253, 0.008332121
    %v1255 = vmul.f32 %v1252, %v1254
    %v1256 = vadd.f32 %v1255, -0.16666654
    %v1257 = vmul.f32 %v1252, %v1256
    %v1258 = vadd.f32 %v1257, 1.0
    %v1259 = vmul.f32 %v1258, %v1243
    %vm1260 = vweird.f32 %v38
    %v1261 = vand.u32 %v1244, 3
    %vm1262 = vcmp.lt.s32.totalorder %v1261, 2
    %vm1263 = vcmp.eq.s32.totalorder %v1261, 0
    %v1264 = vxor.u32 %v1259, 2147483648
    %v1265 = vsel %vm1263, %v1251, %v1264
    %vm1266 = vcmp.eq.s32.totalorder %v1261, 2
    %v1267 = vxor.u32 %v1251, 2147483648
    %v1268 = vsel %vm1266, %v1267, %v1259
    %v1269 = vsel %vm1262, %v1265, %v1268
    %v1270 = vsel %vm1260, nan, %v1269
    %v1271 = vmul.f32 %v192, 0.5
    %v1272 = vmul.f32 %v346, 0.5
    %v1273 = vmul.f32 %v500, 0.5
    %v1274 = vmul.f32 %v654, 0.5
    %v1275 = vmul.f32 %v808, 0.5
    %v1276 = vmul.f32 %v962, 0.5
    %v1277 = vmul.f32 %v1116, 0.5
    %v1278 = vmul.f32 %v1270, 0.5
    %v1279 = vadd.f32 %v1271, 0.5
    %v1280 = vadd.f32 %v1272, 0.5
    %v1281 = vadd.f32 %v1273, 0.5
    %v1282 = vadd.f32 %v1274, 0.5
    %v1283 = vadd.f32 %v1275, 0.5
    %v1284 = vadd.f32 %v1276, 0.5
    %v1285 = vadd.f32 %v1277, 0.5
    %v1286 = vadd.f32 %v1278, 0.5
    %vm1287 = vcmp.lt.f32.partialorder %v23, 5.0
    %vm1288 = vcmp.lt.f32.partialorder %v24, 5.0
    %vm1289 = vcmp.lt.f32.partialorder %v25, 5.0
    %vm1290 = vcmp.lt.f32.partialorder %v26, 5.0
    %vm1291 = vcmp.lt.f32.partialorder %v27, 5.0
    %vm1292 = vcmp.lt.f32.partialorder %v28, 5.0
    %vm1293 = vcmp.lt.f32.partialorder %v29, 5.0
    %vm1294 = vcmp.lt.f32.partialorder %v30, 5.0
    %v1295 = vsel %vm1287, %v1279, 0.0
    %v1296 = vsel %vm1288, %v1280, 0.0
    %v1297 = vsel %vm1289, %v1281, 0.0
    %v1298 = vsel %vm1290, %v1282, 0.0
    %v1299 = vsel %vm1291, %v1283, 0.0
    %v1300 = vsel %vm1292, %v1284, 0.0
    %v1301 = vsel %vm1293, %v1285, 0.0
    %v1302 = vsel %vm1294, %v1286, 0.0
    %1303 = vst [vmem:[#allocation5] sm:$0xff] %v1295
    %1304 = vst [vmem:[#allocation5 + $0x8] sm:$0xff] %v1296
    %1305 = vst [vmem:[#allocation5 + $0x10] sm:$0xff] %v1297
    %1306 = vst [vmem:[#allocation5 + $0x18] sm:$0xff] %v1298
    %1307 = vst [vmem:[#allocation5 + $0x20] sm:$0xff] %v1299
    %1308 = vst [vmem:[#allocation5 + $0x28] sm:$0xff] %v1300
    %1309 = vst [vmem:[#allocation5 + $0x30] sm:$0xff] %v1301
    %1310 = vst [vmem:[#allocation5 + $0x38] sm:$0xff] %v1302
    // Predicated region
    $region10: #{tpu_custom_call.1} parent=1 // pred_check
      _
    $region11: #{tpu_custom_call.1} parent=1 // pred_check_branch
      %1312 = sbr.rel (0) target = $region13
    $region12: #{tpu_custom_call.1} parent=1 // pred_region
      %1314 = vsyncadd [#allocation4], 0
      %s1316 = sshll.u32 [#allocation5], 4
      %s1317 = int_to_ptr.vmem [resolvable:$true] %s1316
      %s1318 = sshll.u32 %s1, 4
      %s1319 = int_to_ptr.hbm [resolvable:$true] %s1318
      %1321 = dma.vmem_to_hbm [thread:$0]  %s1317, 1024, %s1319, [#allocation4]
    $region13: #{tpu_custom_call.1} parent=1 // pred_fallthru
      _
    // Predicated region
    $region14: #{tpu_custom_call.1} parent=1 // pred_check
      _
    $region15: #{tpu_custom_call.1} parent=1 // pred_check_branch
      %1323 = sbr.rel (0) target = $region17
    $region16: #{tpu_custom_call.1} parent=1 // pred_region
      %1325 = dma.done [#allocation4], 1024
    $region17: #{tpu_custom_call.1} parent=1 // pred_fallthru
      _
    %1326 = vsyncpa [#allocation3], 1
    %1327 = vsyncpa [#allocation4], 1

</llo_original>
